<compile_context>
chip_gen: v6e
topology: v6e:2x2x1
jax: 0.10.0
libtpu: 0.0.40
codegen_flags: <defaults>
</compile_context>

<pallas_src>
import functools

import jax
import jax.numpy as jnp
from jax.experimental import pallas as pl
from jax.experimental.pallas import tpu as pltpu


def _ce_kernel(logits_ref, target_ref, weights_ref, loss_ref,
               m_ref, l_ref, *, num_classes, tc, mask_cols):
    """One (TB, TC) class tile: online logsumexp + fused target-logit pick."""
    k = pl.program_id(1)

    @pl.when(k == 0)
    def _init():
        m_ref[...] = jnp.full(m_ref.shape, -jnp.inf, dtype=jnp.float32)
        l_ref[...] = jnp.zeros(l_ref.shape, dtype=jnp.float32)
        loss_ref[...] = jnp.zeros(loss_ref.shape, dtype=jnp.float32)

    x = logits_ref[...].astype(jnp.float32)            # (TB, TC)
    tb, tcur = x.shape

    # Tile-local column indices (no global-index add needed).
    col = jax.lax.broadcasted_iota(jnp.int32, (tb, tcur), 1)

    # Fused pick of logits[i, target[i]]: the target class lives in exactly one
    # class tile, so a masked sum accumulates it exactly once.  Accumulate into
    # the resident output block (it stays in VMEM across the class axis).
    t_local = target_ref[...] - k * tc                 # (TB, 1) int32
    hit = col == t_local
    loss_ref[...] += jnp.sum(jnp.where(hit, x, 0.0), axis=1, keepdims=True)

    # Mask columns past C only when the class dim is not tile-aligned (edge
    # tiles may extend beyond the array — their contents are undefined).
    if mask_cols:
        valid = col < (num_classes - k * tc)
        xm = jnp.where(valid, x, -jnp.inf)
    else:
        xm = x

    # Online (running-max) logsumexp across class tiles.
    m_prev = m_ref[...]
    m_new = jnp.maximum(m_prev, jnp.max(xm, axis=1, keepdims=True))
    l_ref[...] = (l_ref[...] * jnp.exp(m_prev - m_new)
                  + jnp.sum(jnp.exp(xm - m_new), axis=1, keepdims=True))
    m_ref[...] = m_new

    @pl.when(k == pl.num_programs(1) - 1)
    def _finalize():
        w = weights_ref[...]                           # (TB, 1) f32
        lse = m_ref[...] + jnp.log(l_ref[...])
        loss_ref[...] = (lse - loss_ref[...]) * w


def cross_entropy_loss(logits, target, weights=None, aggregate="mean",
                       *, tb_max=256, tc_max=4096):
    """JAX/Pallas equivalent of CrossEntropyLoss.forward.

    tb_max must be a multiple of 8, tc_max a multiple of 128 (only used when
    the corresponding dimension is larger than the tile; otherwise the full
    dimension is used as the block, which Pallas always accepts).
    """
    assert aggregate in ("sum", "mean", None)
    assert logits.ndim == 2
    B, C = logits.shape

    if target.ndim == 2:
        target = target.reshape(-1)
    t2 = target.reshape(B, 1).astype(jnp.int32)
    if weights is None:
        w2 = jnp.ones((B, 1), jnp.float32)
    else:
        w2 = jnp.asarray(weights).reshape(B, 1).astype(jnp.float32)

    # Tile sizes: use the full dim when it fits, otherwise HW-aligned tiles.
    TB = B if B <= tb_max else tb_max
    TC = C if C <= tc_max else tc_max
    grid = (pl.cdiv(B, TB), pl.cdiv(C, TC))

    kernel = functools.partial(_ce_kernel, num_classes=C, tc=TC,
                               mask_cols=(C % TC != 0))

    cost = pl.CostEstimate(
        flops=6 * B * C,
        transcendentals=B * C,
        bytes_accessed=B * C * logits.dtype.itemsize + 3 * B * 4,
    )

    loss = pl.pallas_call(
        kernel,
        out_shape=jax.ShapeDtypeStruct((B, 1), jnp.float32),
        grid_spec=pltpu.PrefetchScalarGridSpec(
            num_scalar_prefetch=0,
            grid=grid,
            in_specs=[
                pl.BlockSpec((TB, TC), lambda i, k: (i, k)),   # logits tile
                pl.BlockSpec((TB, 1), lambda i, k: (i, 0)),    # target column
                pl.BlockSpec((TB, 1), lambda i, k: (i, 0)),    # weight column
            ],
            out_specs=pl.BlockSpec((TB, 1), lambda i, k: (i, 0)),
            scratch_shapes=[pltpu.VMEM((TB, 1), jnp.float32)] * 2,
        ),
        compiler_params=pltpu.CompilerParams(
            dimension_semantics=("parallel", "arbitrary")),
        cost_estimate=cost,
    )(logits, t2, w2)   # logits passed in native dtype (no wrapper f32 copy)

    loss = loss[:, 0]  # (B,)
    if aggregate == "sum":
        return loss.sum()
    if aggregate == "mean":
        return loss.mean()
    return loss


def _reference(logits, target, weights=None, aggregate="mean"):
    x = logits.astype(jnp.float32)
    lse = jax.nn.logsumexp(x, axis=1)
    picked = jnp.take_along_axis(
        x, target.reshape(-1, 1).astype(jnp.int32), axis=1)[:, 0]
    loss = lse - picked
    if weights is not None:
        loss = loss * weights.astype(jnp.float32)
    if aggregate == "sum":
        return loss.sum()
    if aggregate == "mean":
        return loss.mean()
    return loss


if __name__ == "__main__":
    key = jax.random.PRNGKey(0)
    ks = jax.random.split(key, 9)

    # -- small single-tile case (f32 logits) ------------------------------
    B, C = 8, 32
    logits = jax.random.normal(ks[0], (B, C), dtype=jnp.float32)
    target = jax.random.randint(ks[1], (B,), 0, C, dtype=jnp.int32)
    weights = jax.random.uniform(ks[2], (B,), dtype=jnp.float32)

    out_mean = cross_entropy_loss(logits, target, None, "mean")
    out_sum_w = cross_entropy_loss(logits, target, weights, "sum")
    out_vec = cross_entropy_loss(logits, target, weights, None)

    # -- multi-tile case (bf16 logits, partial edge tiles on both axes) ---
    B2, C2 = 24, 300
    logits2 = jax.random.normal(ks[3], (B2, C2), dtype=jnp.bfloat16)
    target2 = jax.random.randint(ks[4], (B2,), 0, C2, dtype=jnp.int32)
    weights2 = jax.random.uniform(ks[5], (B2,), dtype=jnp.float32)
    out_vec2 = cross_entropy_loss(logits2, target2, weights2, None,
                                  tb_max=16, tc_max=128)

    # -- multi-tile case, class dim tile-aligned (static no-mask path) ----
    B3, C3 = 16, 256
    logits3 = jax.random.normal(ks[6], (B3, C3), dtype=jnp.float32)
    target3 = jax.random.randint(ks[7], (B3,), 0, C3, dtype=jnp.int32)
    out_vec3 = cross_entropy_loss(logits3, target3, None, None,
                                  tb_max=8, tc_max=128)

    jax.block_until_ready((out_mean, out_sum_w, out_vec, out_vec2, out_vec3))

    assert jnp.allclose(out_mean, _reference(logits, target, None, "mean"),
                        atol=1e-5, rtol=1e-5)
    assert jnp.allclose(out_sum_w, _reference(logits, target, weights, "sum"),
                        atol=1e-5, rtol=1e-5)
    assert jnp.allclose(out_vec, _reference(logits, target, weights, None),
                        atol=1e-5, rtol=1e-5)
    assert jnp.allclose(out_vec2, _reference(logits2, target2, weights2, None),
                        atol=1e-4, rtol=1e-4)
    assert jnp.allclose(out_vec3, _reference(logits3, target3, None, None),
                        atol=1e-5, rtol=1e-5)

    print("KERNEL_OK")
</pallas_src>

<mosaic_0001>
module attributes {stable_mosaic.version = 11 : i64} {
  func.func @_ce_kernel(%arg0: i32, %arg1: i32, %arg2: memref<8x32xf32, #tpu.memory_space<vmem>>, %arg3: memref<8x1xi32, #tpu.memory_space<vmem>>, %arg4: memref<8x1xf32, #tpu.memory_space<vmem>>, %arg5: memref<8x1xf32, #tpu.memory_space<vmem>>, %arg6: memref<8x1xf32, #tpu.memory_space<vmem>>, %arg7: memref<8x1xf32, #tpu.memory_space<vmem>>) attributes {dimension_semantics = [#tpu.dimension_semantics<parallel>, #tpu.dimension_semantics<arbitrary>], iteration_bounds = array<i64: 1, 1>, scalar_prefetch = 0 : i64, scratch_operands = 2 : i64, tpu.core_type = #tpu.core_type<tc>, window_params = [{transform_indices = @transform_0, window_bounds = array<i64: 8, 32>}, {transform_indices = @transform_1, window_bounds = array<i64: 8, 1>}, {transform_indices = @transform_2, window_bounds = array<i64: 8, 1>}, {transform_indices = @transform_3, window_bounds = array<i64: 8, 1>}]} {
    %c0_i32 = arith.constant 0 : i32
    %0 = arith.cmpi eq, %arg1, %c0_i32 : i32
    %1 = arith.extui %0 : i1 to i32
    %c0_i32_0 = arith.constant 0 : i32
    %2 = arith.cmpi ne, %1, %c0_i32_0 : i32
    scf.if %2 {
      %cst_21 = arith.constant 0xFF800000 : f32
      %37 = vector.broadcast %cst_21 : f32 to vector<8x1xf32>
      %c0_22 = arith.constant 0 : index
      %c0_23 = arith.constant 0 : index
      %38 = vector.load %arg6[%c0_22, %c0_23] : memref<8x1xf32, #tpu.memory_space<vmem>>, vector<8x1xf32>
      tpu.vector_store %arg6[%c0_22, %c0_23], %37 {strides = array<i32>} : memref<8x1xf32, #tpu.memory_space<vmem>>, vector<8x1xf32>,
      %cst_24 = arith.constant 0.000000e+00 : f32
      %39 = vector.broadcast %cst_24 : f32 to vector<8x1xf32>
      %c0_25 = arith.constant 0 : index
      %c0_26 = arith.constant 0 : index
      %40 = vector.load %arg7[%c0_25, %c0_26] : memref<8x1xf32, #tpu.memory_space<vmem>>, vector<8x1xf32>
      tpu.vector_store %arg7[%c0_25, %c0_26], %39 {strides = array<i32>} : memref<8x1xf32, #tpu.memory_space<vmem>>, vector<8x1xf32>,
      %cst_27 = arith.constant 0.000000e+00 : f32
      %41 = vector.broadcast %cst_27 : f32 to vector<8x1xf32>
      %c0_28 = arith.constant 0 : index
      %c0_29 = arith.constant 0 : index
      %42 = vector.load %arg5[%c0_28, %c0_29] : memref<8x1xf32, #tpu.memory_space<vmem>>, vector<8x1xf32>
      tpu.vector_store %arg5[%c0_28, %c0_29], %41 {strides = array<i32>} : memref<8x1xf32, #tpu.memory_space<vmem>>, vector<8x1xf32>,
    } else {
    }
    %c0 = arith.constant 0 : index
    %c0_1 = arith.constant 0 : index
    %3 = vector.load %arg2[%c0, %c0_1] : memref<8x32xf32, #tpu.memory_space<vmem>>, vector<8x32xf32>
    %4 = tpu.iota {dimensions = array<i32: 1>} : vector<8x32xi32>
    %c0_2 = arith.constant 0 : index
    %c0_3 = arith.constant 0 : index
    %5 = vector.load %arg3[%c0_2, %c0_3] : memref<8x1xi32, #tpu.memory_space<vmem>>, vector<8x1xi32>
    %c32_i32 = arith.constant 32 : i32
    %6 = arith.muli %arg1, %c32_i32 : i32
    %7 = vector.broadcast %6 : i32 to vector<8x1xi32>
    %8 = arith.subi %5, %7 : vector<8x1xi32>
    %9 = vector.broadcast %8 : vector<8x1xi32> to vector<8x32xi32>
    %10 = arith.cmpi eq, %4, %9 : vector<8x32xi32>
    %c0_4 = arith.constant 0 : index
    %c0_5 = arith.constant 0 : index
    %11 = vector.load %arg5[%c0_4, %c0_5] : memref<8x1xf32, #tpu.memory_space<vmem>>, vector<8x1xf32>
    %cst = arith.constant 0.000000e+00 : f32
    %12 = vector.broadcast %cst : f32 to vector<8x32xf32>
    %13 = arith.select %10, %3, %12 : vector<8x32xi1>, vector<8x32xf32>
    %cst_6 = arith.constant dense<0.000000e+00> : vector<8xf32>
    %14 = vector.multi_reduction <add>, %13, %cst_6 [1] : vector<8x32xf32> to vector<8xf32>
    %15 = vector.shape_cast %14 : vector<8xf32> to vector<8x1xf32>
    %16 = arith.addf %11, %15 : vector<8x1xf32>
    %c0_7 = arith.constant 0 : index
    %c0_8 = arith.constant 0 : index
    %17 = vector.load %arg5[%c0_7, %c0_8] : memref<8x1xf32, #tpu.memory_space<vmem>>, vector<8x1xf32>
    tpu.vector_store %arg5[%c0_7, %c0_8], %16 {strides = array<i32>} : memref<8x1xf32, #tpu.memory_space<vmem>>, vector<8x1xf32>,
    %c0_9 = arith.constant 0 : index
    %c0_10 = arith.constant 0 : index
    %18 = vector.load %arg6[%c0_9, %c0_10] : memref<8x1xf32, #tpu.memory_space<vmem>>, vector<8x1xf32>
    %cst_11 = arith.constant dense<0xFF800000> : vector<8xf32>
    %19 = vector.multi_reduction <maximumf>, %3, %cst_11 [1] : vector<8x32xf32> to vector<8xf32>
    %20 = vector.shape_cast %19 : vector<8xf32> to vector<8x1xf32>
    %21 = arith.maximumf %18, %20 : vector<8x1xf32>
    %c0_12 = arith.constant 0 : index
    %c0_13 = arith.constant 0 : index
    %22 = vector.load %arg7[%c0_12, %c0_13] : memref<8x1xf32, #tpu.memory_space<vmem>>, vector<8x1xf32>
    %23 = arith.subf %18, %21 : vector<8x1xf32>
    %24 = math.exp %23 : vector<8x1xf32>
    %25 = arith.mulf %22, %24 : vector<8x1xf32>
    %26 = vector.broadcast %21 : vector<8x1xf32> to vector<8x32xf32>
    %27 = arith.subf %3, %26 : vector<8x32xf32>
    %28 = math.exp %27 : vector<8x32xf32>
    %cst_14 = arith.constant dense<0.000000e+00> : vector<8xf32>
    %29 = vector.multi_reduction <add>, %28, %cst_14 [1] : vector<8x32xf32> to vector<8xf32>
    %30 = vector.shape_cast %29 : vector<8xf32> to vector<8x1xf32>
    %31 = arith.addf %25, %30 : vector<8x1xf32>
    %c0_15 = arith.constant 0 : index
    %c0_16 = arith.constant 0 : index
    %32 = vector.load %arg7[%c0_15, %c0_16] : memref<8x1xf32, #tpu.memory_space<vmem>>, vector<8x1xf32>
    tpu.vector_store %arg7[%c0_15, %c0_16], %31 {strides = array<i32>} : memref<8x1xf32, #tpu.memory_space<vmem>>, vector<8x1xf32>,
    %c0_17 = arith.constant 0 : index
    %c0_18 = arith.constant 0 : index
    %33 = vector.load %arg6[%c0_17, %c0_18] : memref<8x1xf32, #tpu.memory_space<vmem>>, vector<8x1xf32>
    tpu.vector_store %arg6[%c0_17, %c0_18], %21 {strides = array<i32>} : memref<8x1xf32, #tpu.memory_space<vmem>>, vector<8x1xf32>,
    %c0_i32_19 = arith.constant 0 : i32
    %34 = arith.cmpi eq, %arg1, %c0_i32_19 : i32
    %35 = arith.extui %34 : i1 to i32
    %c0_i32_20 = arith.constant 0 : i32
    %36 = arith.cmpi ne, %35, %c0_i32_20 : i32
    scf.if %36 {
      %c0_21 = arith.constant 0 : index
      %c0_22 = arith.constant 0 : index
      %37 = vector.load %arg4[%c0_21, %c0_22] : memref<8x1xf32, #tpu.memory_space<vmem>>, vector<8x1xf32>
      %c0_23 = arith.constant 0 : index
      %c0_24 = arith.constant 0 : index
      %38 = vector.load %arg6[%c0_23, %c0_24] : memref<8x1xf32, #tpu.memory_space<vmem>>, vector<8x1xf32>
      %c0_25 = arith.constant 0 : index
      %c0_26 = arith.constant 0 : index
      %39 = vector.load %arg7[%c0_25, %c0_26] : memref<8x1xf32, #tpu.memory_space<vmem>>, vector<8x1xf32>
      %40 = math.log %39 : vector<8x1xf32>
      %41 = arith.addf %38, %40 : vector<8x1xf32>
      %c0_27 = arith.constant 0 : index
      %c0_28 = arith.constant 0 : index
      %42 = vector.load %arg5[%c0_27, %c0_28] : memref<8x1xf32, #tpu.memory_space<vmem>>, vector<8x1xf32>
      %43 = arith.subf %41, %42 : vector<8x1xf32>
      %44 = arith.mulf %43, %37 : vector<8x1xf32>
      %c0_29 = arith.constant 0 : index
      %c0_30 = arith.constant 0 : index
      %45 = vector.load %arg5[%c0_29, %c0_30] : memref<8x1xf32, #tpu.memory_space<vmem>>, vector<8x1xf32>
      tpu.vector_store %arg5[%c0_29, %c0_30], %44 {strides = array<i32>} : memref<8x1xf32, #tpu.memory_space<vmem>>, vector<8x1xf32>,
    } else {
    }
    return
  }
  func.func @transform_0(%arg0: i32, %arg1: i32) -> (i32, i32) {
    %c0_i32 = arith.constant 0 : i32
    return %arg0, %arg1 : i32, i32
  }
  func.func @transform_1(%arg0: i32, %arg1: i32) -> (i32, i32) {
    %c0_i32 = arith.constant 0 : i32
    %c0_i32_0 = arith.constant 0 : i32
    return %arg0, %c0_i32 : i32, i32
  }
  func.func @transform_2(%arg0: i32, %arg1: i32) -> (i32, i32) {
    %c0_i32 = arith.constant 0 : i32
    %c0_i32_0 = arith.constant 0 : i32
    return %arg0, %c0_i32 : i32, i32
  }
  func.func @transform_3(%arg0: i32, %arg1: i32) -> (i32, i32) {
    %c0_i32 = arith.constant 0 : i32
    %c0_i32_0 = arith.constant 0 : i32
    return %arg0, %c0_i32 : i32, i32
  }
}

</mosaic_0001>

<llo_original>
// kernel: tpu_custom_call.1
$region0: #{tpu_custom_call.1}
  #allocation0 [shape = 'u32[]', space=smem, size = 0x4, offset = 0x4, fixed_abs, tag = 'smem constant byte address 0x4 - core index']
  #allocation1 [shape = 'u32[144,128]{1,0:T(1,128)}', space=vmem, size = 0x12000, scoped, tag = 'internal scratch']
  #allocation2 [shape = 'f32[8,1]{1,0:T(8,128)}', space=vmem, size = 0x1000, scoped, tag = 'scratch operand']
  #allocation3 [shape = 'f32[8,1]{1,0:T(8,128)}', space=vmem, size = 0x1000, scoped, tag = 'scratch operand']
  %s0 = inlined_call_operand.vmem [shape: f32[8,32], index: 0, kind: input, shape index: {}]
  %s1 = inlined_call_operand.vmem [shape: s32[8,1], index: 1, kind: input, shape index: {}]
  %s2 = inlined_call_operand.vmem [shape: f32[8,1], index: 2, kind: input, shape index: {}]
  %s3 = inlined_call_operand.vmem [shape: f32[8,1], index: 3, kind: output, shape index: {}]
  %s4 = sld [smem:[#allocation0]]
  $region30: #{tpu_custom_call.1} parent=0
    _
  %s6 = ssub.s32 1, %s4
  %s7 = scalar_select 0, %s6, %s4
  // Predicated region
  $region2: #{tpu_custom_call.1} parent=0 // pred_check
    _
  $region3: #{tpu_custom_call.1} parent=0 // pred_check_branch
    %9 = sbr.rel (0) target = $region5
  $region4: #{tpu_custom_call.1} parent=0 // pred_region
    _
  $region5: #{tpu_custom_call.1} parent=0 // pred_fallthru
    _
  // Predicated region
  $region6: #{tpu_custom_call.1} parent=0 // pred_check
    _
  $region7: #{tpu_custom_call.1} parent=0 // pred_check_branch
    %11 = sbr.rel (0) target = $region9
  $region8: #{tpu_custom_call.1} parent=0 // pred_region
    _
  $region9: #{tpu_custom_call.1} parent=0 // pred_fallthru
    _
  // Predicated region
  $region10: #{tpu_custom_call.1} parent=0 // pred_check
    _
  $region11: #{tpu_custom_call.1} parent=0 // pred_check_branch
    %13 = sbr.rel (0) target = $region13
  $region12: #{tpu_custom_call.1} parent=0 // pred_region
    _
  $region13: #{tpu_custom_call.1} parent=0 // pred_fallthru
    _
  %p14 = scmp.eq.s32.totalorder 0, 0
  // Predicated region
  $region14: #{tpu_custom_call.1} parent=0 // pred_check
    %p15 = pneg %p14
  $region15: #{tpu_custom_call.1} parent=0 // pred_check_branch
    %17 = sbr.rel (%p15) target = $region17
  $region16: #{tpu_custom_call.1} parent=0 // pred_region
    %vm18 = vcmask 7168
    %19 = vst.msk [vmem:[#allocation2] sm:$0xff] %vm18, -inf
    %20 = vst.msk [vmem:[#allocation3] sm:$0xff] %vm18, 0.0
    %21 = vst.msk [vmem:[%s3] sm:$0xff] %vm18, 0.0
  $region17: #{tpu_custom_call.1} parent=0 // pred_fallthru
    _
  %v22 = vld [vmem:[%s0] sm:$0xff]
  %v23 = vlaneseq
  %v24 = vand.u32 %v23, 127
  %v25 = vld [vmem:[%s1] sm:$0xff]
  %s26 = smul.u32 0, 32
  %v27 = vstv %s26
  %v28 = vsub.s32 %v25, %v27
  %29 = vset.pattern.permute.xlu0 0
  %30 = vperm.xlu0 %29, %v28
  %v31 = vpop.permute.xlu0 %30
  %vm32 = vcmp.eq.s32.totalorder %v24, %v31
  %v33 = vld [vmem:[%s3] sm:$0xff]
  %v34 = vsel %vm32, %v22, 0.0
  %vm35 = vcmask 261120
  %v36 = vsel %vm35, %v34, 0.0
  %37 = vadd.xlane.f32.xlu0 %v36
  %v38 = vpop.xlane.xlu0 %37
  %v39 = vadd.f32 %v33, %v38
  %vm40 = vcmask 7168
  %41 = vst.msk [vmem:[%s3] sm:$0xff] %vm40, %v39
  %v42 = vld [vmem:[#allocation2] sm:$0xff]
  %v43 = vsel %vm35, %v22, -inf
  %44 = vmax.xlane.f32.xlu0 %v43
  %v45 = vpop.xlane.xlu0 %44
  %v46 = vmax.f32 %v42, %v45
  %v47 = vld [vmem:[#allocation3] sm:$0xff]
  %v48 = vsub.f32 %v42, %v46
  %v49 = vmul.f32 %v48, 1.442695
  %v50 = vpow.pop %v49
  %v51 = vmul.f32 %v47, %v50
  %53 = vset.pattern.permute.xlu0 0
  %54 = vperm.xlu0 %53, %v46
  %v55 = vpop.permute.xlu0 %54
  %v57 = vsub.f32 %v22, %v55
  %v58 = vmul.f32 %v57, 1.442695
  %v59 = vpow.pop %v58
  %v60 = vsel %vm35, %v59, 0.0
  %61 = vadd.xlane.f32.xlu0 %v60
  %v62 = vpop.xlane.xlu0 %61
  %v63 = vadd.f32 %v51, %v62
  %64 = vst.msk [vmem:[#allocation3] sm:$0xff] %vm40, %v63
  %65 = vst.msk [vmem:[#allocation2] sm:$0xff] %vm40, %v46
  // Predicated region
  $region18: #{tpu_custom_call.1} parent=0 // pred_check
    %p66 = pneg %p14
  $region19: #{tpu_custom_call.1} parent=0 // pred_check_branch
    %68 = sbr.rel (%p66) target = $region21
  $region20: #{tpu_custom_call.1} parent=0 // pred_region
    %v69 = vld [vmem:[%s2] sm:$0xff]
    %v70 = vld [vmem:[#allocation2] sm:$0xff]
    %v71 = vld [vmem:[#allocation3] sm:$0xff]
    %v72 = vlog2.pop %v71
    %v73 = vmul.f32 %v72, 0.6931472
    %v74 = vadd.f32 %v70, %v73
    %v75 = vld [vmem:[%s3] sm:$0xff]
    %v76 = vsub.f32 %v74, %v75
    %v77 = vmul.f32 %v76, %v69
    %78 = vst.msk [vmem:[%s3] sm:$0xff] %vm40, %v77
  $region21: #{tpu_custom_call.1} parent=0 // pred_fallthru
    _
  // Predicated region
  $region22: #{tpu_custom_call.1} parent=0 // pred_check
    _
  $region23: #{tpu_custom_call.1} parent=0 // pred_check_branch
    %80 = sbr.rel (0) target = $region25
  $region24: #{tpu_custom_call.1} parent=0 // pred_region
    _
  $region25: #{tpu_custom_call.1} parent=0 // pred_fallthru
    _
  // Predicated region
  $region26: #{tpu_custom_call.1} parent=0 // pred_check
    _
  $region27: #{tpu_custom_call.1} parent=0 // pred_check_branch
    %82 = sbr.rel (0) target = $region29
  $region28: #{tpu_custom_call.1} parent=0 // pred_region
    _
  $region29: #{tpu_custom_call.1} parent=0 // pred_fallthru
    _

</llo_original>
